<compile_context>
chip_gen: v6e
topology: v6e:2x2x1
jax: 0.10.0
libtpu: 0.0.40
codegen_flags: <defaults>
</compile_context>

<pallas_src>
import functools
import math

import jax
import jax.numpy as jnp
from jax.experimental import pallas as pl
from jax.experimental.pallas import tpu as pltpu

_LANE = 128
_MAX_TILE_ROWS = 8192        # 8192 * 128 * 4B = 4 MiB per f32 input block
_EPS = 1e-8
_NEG_LOG_EPS = -math.log(_EPS)   # reference clamps each -log term at this value


def _num_tensorcores():
    """Best-effort per-chip TensorCore count: 2 on dual-TC (v7x-class) parts,
    1 on v5e/v6e.  Used to shard the streaming grid across cores."""
    try:
        kind = jax.devices()[0].device_kind.lower()
    except Exception:
        return 1
    return 2 if "v7" in kind else 1


def _bilinear_resize_align_corners(x, out_h, out_w):
    """Bilinear resize with align_corners=True, matching F.interpolate.

    x: (N, C, H, W) float32
    """
    # TODO(synk): fuse this align_corners upsample into the Pallas kernel so
    # the full-resolution f32 target is never materialized in HBM.
    N, C, H, W = x.shape
    if out_h == H and out_w == W:
        return x

    if out_h > 1:
        ys = jnp.arange(out_h, dtype=jnp.float32) * ((H - 1) / (out_h - 1))
    else:
        ys = jnp.zeros((out_h,), jnp.float32)
    if out_w > 1:
        xs = jnp.arange(out_w, dtype=jnp.float32) * ((W - 1) / (out_w - 1))
    else:
        xs = jnp.zeros((out_w,), jnp.float32)

    y0 = jnp.clip(jnp.floor(ys).astype(jnp.int32), 0, H - 1)
    y1 = jnp.clip(y0 + 1, 0, H - 1)
    x0 = jnp.clip(jnp.floor(xs).astype(jnp.int32), 0, W - 1)
    x1 = jnp.clip(x0 + 1, 0, W - 1)
    wy = (ys - y0.astype(jnp.float32)).reshape(1, 1, out_h, 1)
    wx = (xs - x0.astype(jnp.float32)).reshape(1, 1, 1, out_w)

    row0 = x[:, :, y0, :]   # (N, C, out_h, W)
    row1 = x[:, :, y1, :]
    v00 = row0[:, :, :, x0]
    v01 = row0[:, :, :, x1]
    v10 = row1[:, :, :, x0]
    v11 = row1[:, :, :, x1]

    top = v00 * (1.0 - wx) + v01 * wx
    bot = v10 * (1.0 - wx) + v11 * wx
    return top * (1.0 - wy) + bot * wy


def _bce_partial_kernel(s_ref, t_ref, out_ref, *, pos_weight, n_valid,
                        tile_rows, tiles_per_split, num_full_tiles,
                        total_tiles, has_tail):
    c = pl.program_id(0)                 # TensorCore split index
    i = pl.program_id(1)                 # streaming tile index within split
    g = c * tiles_per_split + i          # global tile index along the row axis

    @pl.when(i == 0)
    def _():
        out_ref[...] = jnp.zeros_like(out_ref)

    def lane_partial_sum(mask_tail):
        s = s_ref[...].astype(jnp.float32)     # (tile_rows, 128)
        t = t_ref[...].astype(jnp.float32)
        # Stable BCE-with-logits via softplus (2 EUP transcendentals/elem):
        #   a = softplus(-s) = -log(sigmoid(s)),  b = softplus(s) = a + s.
        # Clamp at -log(eps) to track the reference's eps saturation.
        # TODO(synk): exact eps-form (-log(sigmoid(s)+1e-8)) differs by up to
        # log(2) right around |s|~18.4; use the 4-transcendental eps form if
        # bit-level parity with PyTorch is required for saturated logits.
        l = jnp.log1p(jnp.exp(-jnp.abs(s)))
        a = jnp.maximum(-s, 0.0) + l
        b = a + s
        a = jnp.minimum(a, _NEG_LOG_EPS)
        b = jnp.minimum(b, _NEG_LOG_EPS)
        if pos_weight == 1.0:                  # static trace-time fast path
            loss = b + t * (a - b)
        else:
            loss = jnp.float32(pos_weight) * t * a + (1.0 - t) * b
        if mask_tail:
            # Rebuilt in-kernel only for the single tile straddling n_valid.
            row = jax.lax.broadcasted_iota(jnp.int32, (tile_rows, _LANE), 0)
            lane = jax.lax.broadcasted_iota(jnp.int32, (tile_rows, _LANE), 1)
            grow = g * tile_rows + row
            full_rows = n_valid // _LANE       # static python ints
            rem = n_valid % _LANE
            valid = (grow < full_rows) | ((grow == full_rows) & (lane < rem))
            loss = jnp.where(valid, loss, 0.0)
        return jnp.sum(loss, axis=0, keepdims=True)[None]   # (1, 1, 128)

    if not has_tail:
        # Fully aligned problem: no mask branch is ever emitted.
        out_ref[...] += lane_partial_sum(False)
    else:
        @pl.when(g < num_full_tiles)           # interior tiles: no mask work
        def _():
            out_ref[...] += lane_partial_sum(False)

        @pl.when(jnp.logical_and(g >= num_full_tiles, g < total_tiles))
        def _():                               # the single boundary tile
            out_ref[...] += lane_partial_sum(True)
        # Tiles with g >= total_tiles (dead tiles from the core split) skip
        # the whole body.


def _bce_sum_pallas(s2d, t2d, *, pos_weight, n_valid, tile_rows, num_splits,
                    tiles_per_split, total_tiles):
    chunk = tile_rows * _LANE
    num_full_tiles = n_valid // chunk
    has_tail = num_full_tiles < num_splits * tiles_per_split

    kernel = functools.partial(
        _bce_partial_kernel,
        pos_weight=pos_weight, n_valid=n_valid, tile_rows=tile_rows,
        tiles_per_split=tiles_per_split, num_full_tiles=num_full_tiles,
        total_tiles=total_tiles, has_tail=has_tail)

    def in_map(c, i):
        # Clamp dead tiles (only possible when the core split doesn't divide
        # the tile count) onto the last real tile; the kernel skips them.
        return (jnp.minimum(c * tiles_per_split + i, total_tiles - 1), 0)

    # Right-size VMEM: 2 inputs x 2 pipeline buffers x tile bytes + slack
    # (~20 MiB at 8192 f32 rows; fits v7x's 64 MiB as well as v5e/v6e's 128).
    need = 2 * tile_rows * _LANE * (s2d.dtype.itemsize + t2d.dtype.itemsize)
    vmem_limit = max(16 << 20, min(need + (4 << 20), 64 << 20))

    if num_splits > 1:
        # Genuinely shard the leading axis across TensorCores on dual-TC parts.
        split_sem = getattr(pltpu, "CORE_PARALLEL", "parallel")
    else:
        split_sem = "arbitrary"

    partials = pl.pallas_call(
        kernel,
        out_shape=jax.ShapeDtypeStruct((num_splits, 1, _LANE), jnp.float32),
        grid_spec=pltpu.PrefetchScalarGridSpec(
            num_scalar_prefetch=0,
            grid=(num_splits, tiles_per_split),
            in_specs=[
                pl.BlockSpec((tile_rows, _LANE), in_map),
                pl.BlockSpec((tile_rows, _LANE), in_map),
            ],
            out_specs=pl.BlockSpec((1, 1, _LANE), lambda c, i: (c, 0, 0)),
        ),
        compiler_params=pltpu.CompilerParams(
            dimension_semantics=(split_sem, "arbitrary"),
            vmem_limit_bytes=vmem_limit),
    )(s2d, t2d)
    return jnp.sum(partials)


def cross_entropy_loss(score, target, ignore_label=-1, pos_weight=1.0):
    """Forward of CrossEntropy: mean BCE-with-logits-style loss (scalar)."""
    del ignore_label  # unused by the reference forward as well
    N, C, ph, pw_ = score.shape
    _, _, h, w = target.shape

    if (ph, pw_) != (h, w):
        target = _bilinear_resize_align_corners(target.astype(jnp.float32),
                                                ph, pw_)
    if target.dtype == jnp.bool_:
        target = target.astype(jnp.uint8)   # stream as 1B/elem; cast in-kernel

    n = N * C * ph * pw_
    rows = -(-n // _LANE)
    pad = rows * _LANE - n

    # Lane-dense (rows, 128) view.  Zero-copy reshape when n % 128 == 0 (the
    # common case); otherwise pad only to the next lane multiple (< 128 elems,
    # never rounded up to tile_rows).  No mask tensor and no dtype upcast is
    # streamed from HBM.
    s = score.reshape(-1)
    t = target.reshape(-1)
    if pad:
        s = jnp.pad(s, (0, pad))
        t = jnp.pad(t, (0, pad))
    s2d = s.reshape(rows, _LANE)
    t2d = t.reshape(rows, _LANE)

    # Tile: full array when it fits, else 8192x128 blocks (8192 is a multiple
    # of 32, so f32 / bf16 / int8 inputs all tile cleanly).  The partial last
    # tile is handled by the in-kernel boundary mask.
    tile_rows = rows if rows <= _MAX_TILE_ROWS else _MAX_TILE_ROWS
    total_tiles = -(-rows // tile_rows)
    num_splits = max(1, min(_num_tensorcores(), total_tiles))
    tiles_per_split = -(-total_tiles // num_splits)

    loss_sum = _bce_sum_pallas(
        s2d, t2d, pos_weight=float(pos_weight), n_valid=n,
        tile_rows=tile_rows, num_splits=num_splits,
        tiles_per_split=tiles_per_split, total_tiles=total_tiles)
    return loss_sum / jnp.float32(n)


def _reference_loss(score, target, pos_weight=1.0):
    """Pure-JAX reference matching the original PyTorch module (eps form)."""
    N, C, ph, pw_ = score.shape
    _, _, h, w = target.shape
    target = target.astype(jnp.float32)
    if (ph, pw_) != (h, w):
        target = _bilinear_resize_align_corners(target, ph, pw_)
    score = score.astype(jnp.float32)
    sig = jax.nn.sigmoid(score)
    ce = (-pos_weight * target * jnp.log(sig + _EPS)
          - (1.0 - target) * jnp.log(1.0 - sig + _EPS))
    return jnp.mean(ce)


if __name__ == "__main__":
    key = jax.random.PRNGKey(0)
    k1, k2 = jax.random.split(key)

    # score: (N, C, H, W) logits ; target: (N, C, h, w) soft labels in [0, 1]
    score = jax.random.normal(k1, (2, 1, 16, 16), dtype=jnp.float32)
    target = jax.random.uniform(k2, (2, 1, 8, 8), dtype=jnp.float32)

    loss = cross_entropy_loss(score, target)
    loss = jax.block_until_ready(loss)

    ref = _reference_loss(score, target)
    assert jnp.allclose(loss, ref, rtol=1e-5, atol=1e-5), (loss, ref)

    print("KERNEL_OK")
</pallas_src>

<mosaic_0001>
module attributes {stable_mosaic.version = 11 : i64} {
  func.func @_bce_partial_kernel(%arg0: i32, %arg1: i32, %arg2: memref<4x128xf32, #tpu.memory_space<vmem>>, %arg3: memref<4x128xf32, #tpu.memory_space<vmem>>, %arg4: memref<1x1x128xf32, #tpu.memory_space<vmem>>) attributes {dimension_semantics = [#tpu.dimension_semantics<arbitrary>, #tpu.dimension_semantics<arbitrary>], iteration_bounds = array<i64: 1, 1>, scalar_prefetch = 0 : i64, scratch_operands = 0 : i64, tpu.core_type = #tpu.core_type<tc>, window_params = [{transform_indices = @transform_0, window_bounds = array<i64: 4, 128>}, {transform_indices = @transform_1, window_bounds = array<i64: 4, 128>}, {transform_indices = @transform_2, window_bounds = array<i64: 1, 1, 128>}]} {
    %c0_i32 = arith.constant 0 : i32
    %0 = arith.cmpi eq, %arg1, %c0_i32 : i32
    %1 = arith.extui %0 : i1 to i32
    %c0_i32_0 = arith.constant 0 : i32
    %2 = arith.cmpi ne, %1, %c0_i32_0 : i32
    scf.if %2 {
      %cst_15 = arith.constant 0.000000e+00 : f32
      %29 = vector.broadcast %cst_15 : f32 to vector<1x1x128xf32>
      %c0_16 = arith.constant 0 : index
      %c0_17 = arith.constant 0 : index
      %c0_18 = arith.constant 0 : index
      %30 = vector.load %arg4[%c0_16, %c0_17, %c0_18] : memref<1x1x128xf32, #tpu.memory_space<vmem>>, vector<1x1x128xf32>
      tpu.vector_store %arg4[%c0_16, %c0_17, %c0_18], %29 {strides = array<i32>} : memref<1x1x128xf32, #tpu.memory_space<vmem>>, vector<1x1x128xf32>,
    } else {
    }
    %c0 = arith.constant 0 : index
    %c0_1 = arith.constant 0 : index
    %c0_2 = arith.constant 0 : index
    %3 = vector.load %arg4[%c0, %c0_1, %c0_2] : memref<1x1x128xf32, #tpu.memory_space<vmem>>, vector<1x1x128xf32>
    %c0_3 = arith.constant 0 : index
    %c0_4 = arith.constant 0 : index
    %4 = vector.load %arg2[%c0_3, %c0_4] : memref<4x128xf32, #tpu.memory_space<vmem>>, vector<4x128xf32>
    %c0_5 = arith.constant 0 : index
    %c0_6 = arith.constant 0 : index
    %5 = vector.load %arg3[%c0_5, %c0_6] : memref<4x128xf32, #tpu.memory_space<vmem>>, vector<4x128xf32>
    %6 = math.absf %4 : vector<4x128xf32>
    %cst = arith.constant 0.000000e+00 : f32
    %7 = vector.broadcast %cst : f32 to vector<4x128xf32>
    %8 = arith.subf %7, %6 : vector<4x128xf32>
    %9 = math.exp %8 : vector<4x128xf32>
    %10 = math.log1p %9 : vector<4x128xf32>
    %cst_7 = arith.constant 0.000000e+00 : f32
    %11 = vector.broadcast %cst_7 : f32 to vector<4x128xf32>
    %12 = arith.subf %11, %4 : vector<4x128xf32>
    %cst_8 = arith.constant 0.000000e+00 : f32
    %13 = vector.broadcast %cst_8 : f32 to vector<4x128xf32>
    %14 = arith.maximumf %12, %13 : vector<4x128xf32>
    %15 = arith.addf %14, %10 : vector<4x128xf32>
    %16 = arith.addf %15, %4 : vector<4x128xf32>
    %cst_9 = arith.constant 18.420681 : f32
    %17 = vector.broadcast %cst_9 : f32 to vector<4x128xf32>
    %18 = arith.minimumf %15, %17 : vector<4x128xf32>
    %cst_10 = arith.constant 18.420681 : f32
    %19 = vector.broadcast %cst_10 : f32 to vector<4x128xf32>
    %20 = arith.minimumf %16, %19 : vector<4x128xf32>
    %21 = arith.subf %18, %20 : vector<4x128xf32>
    %22 = arith.mulf %5, %21 : vector<4x128xf32>
    %23 = arith.addf %20, %22 : vector<4x128xf32>
    %cst_11 = arith.constant dense<0.000000e+00> : vector<128xf32>
    %24 = vector.multi_reduction <add>, %23, %cst_11 [0] : vector<4x128xf32> to vector<128xf32>
    %25 = vector.shape_cast %24 : vector<128xf32> to vector<1x128xf32>
    %26 = vector.shape_cast %25 : vector<1x128xf32> to vector<1x1x128xf32>
    %27 = arith.addf %3, %26 : vector<1x1x128xf32>
    %c0_12 = arith.constant 0 : index
    %c0_13 = arith.constant 0 : index
    %c0_14 = arith.constant 0 : index
    %28 = vector.load %arg4[%c0_12, %c0_13, %c0_14] : memref<1x1x128xf32, #tpu.memory_space<vmem>>, vector<1x1x128xf32>
    tpu.vector_store %arg4[%c0_12, %c0_13, %c0_14], %27 {strides = array<i32>} : memref<1x1x128xf32, #tpu.memory_space<vmem>>, vector<1x1x128xf32>,
    return
  }
  func.func @transform_0(%arg0: i32, %arg1: i32) -> (i32, i32) {
    %c1_i32 = arith.constant 1 : i32
    %0 = arith.muli %arg0, %c1_i32 : i32
    %1 = arith.addi %0, %arg1 : i32
    %c0_i32 = arith.constant 0 : i32
    %2 = arith.minsi %1, %c0_i32 : i32
    %c0_i32_0 = arith.constant 0 : i32
    %c0_i32_1 = arith.constant 0 : i32
    return %2, %c0_i32_0 : i32, i32
  }
  func.func @transform_1(%arg0: i32, %arg1: i32) -> (i32, i32) {
    %c1_i32 = arith.constant 1 : i32
    %0 = arith.muli %arg0, %c1_i32 : i32
    %1 = arith.addi %0, %arg1 : i32
    %c0_i32 = arith.constant 0 : i32
    %2 = arith.minsi %1, %c0_i32 : i32
    %c0_i32_0 = arith.constant 0 : i32
    %c0_i32_1 = arith.constant 0 : i32
    return %2, %c0_i32_0 : i32, i32
  }
  func.func @transform_2(%arg0: i32, %arg1: i32) -> (i32, i32, i32) {
    %c0_i32 = arith.constant 0 : i32
    %c0_i32_0 = arith.constant 0 : i32
    %c0_i32_1 = arith.constant 0 : i32
    return %arg0, %c0_i32, %c0_i32_0 : i32, i32, i32
  }
}

</mosaic_0001>

<llo_original>
// kernel: tpu_custom_call.1
$region0: #{tpu_custom_call.1}
  #allocation0 [shape = 'u32[]', space=smem, size = 0x4, offset = 0x4, fixed_abs, tag = 'smem constant byte address 0x4 - core index']
  #allocation1 [shape = 'u32[144,128]{1,0:T(1,128)}', space=vmem, size = 0x12000, scoped, tag = 'internal scratch']
  %s0 = inlined_call_operand.hbm [shape: f32[4,128], index: 0, kind: input, shape index: {}]
  %s1 = inlined_call_operand.hbm [shape: f32[4,128], index: 1, kind: input, shape index: {}]
  %s2 = inlined_call_operand.hbm [shape: f32[1,1,128], index: 2, kind: output, shape index: {}]
  %s3 = sld [smem:[#allocation0]]
  $region30: #{tpu_custom_call.1} parent=0
    _
  %s5 = ssub.s32 1, %s3
  %s6 = scalar_select 0, %s5, %s3
  $region1: #{tpu_custom_call.1} parent=0
    #allocation2 [shape = 'u8[2048]{0}', space=vmem, size = 0x800, scoped, tag = 'input window, operand 0, single buffered']
    #allocation3 [shape = 's32[1]{0}', space=sflag, size = 0x4, scoped, tag = 'scoped memory for tpu_custom_call.1']
    #allocation4 [shape = 's32[1]{0}', space=sflag, size = 0x4, scoped, tag = 'scoped memory for tpu_custom_call.1']
    #allocation5 [shape = 'u8[2048]{0}', space=vmem, size = 0x800, scoped, tag = 'input window, operand 1, single buffered']
    #allocation6 [shape = 's32[1]{0}', space=sflag, size = 0x4, scoped, tag = 'scoped memory for tpu_custom_call.1']
    #allocation7 [shape = 'u8[512]{0}', space=vmem, size = 0x400, scoped, tag = 'output window, operand 0, single buffered']
    %7 = vsyncpa [#allocation3], 0
    %8 = vsyncpa [#allocation6], 0
    %9 = vsyncpa [#allocation4], 0
    // Predicated region
    $region2: #{tpu_custom_call.1} parent=1 // pred_check
      _
    $region3: #{tpu_custom_call.1} parent=1 // pred_check_branch
      %11 = sbr.rel (0) target = $region5
    $region4: #{tpu_custom_call.1} parent=1 // pred_region
      %s12 = sadd.s32 0, 0
      %p13 = scmp.lt.s32.totalorder %s12, 0
      %s14 = scalar_select %p13, %s12, 0
      %s16 = ssub.s32 64, 64
      %17 = vsyncadd [#allocation3], %s16
      %s18 = smul.addr %s14, 64
      %s19 = scalar_lea.hbm %s0, %s18
      %s21 = sshll.u32 [#allocation2], 4
      %s22 = int_to_ptr.vmem [resolvable:$true] %s21
      %24 = dma.hbm_to_vmem [thread:$0]  %s19, 64, %s22, [#allocation3]
    $region5: #{tpu_custom_call.1} parent=1 // pred_fallthru
      _
    // Predicated region
    $region6: #{tpu_custom_call.1} parent=1 // pred_check
      _
    $region7: #{tpu_custom_call.1} parent=1 // pred_check_branch
      %26 = sbr.rel (0) target = $region9
    $region8: #{tpu_custom_call.1} parent=1 // pred_region
      %s27 = sadd.s32 0, 0
      %p28 = scmp.lt.s32.totalorder %s27, 0
      %s29 = scalar_select %p28, %s27, 0
      %s31 = ssub.s32 64, 64
      %32 = vsyncadd [#allocation6], %s31
      %s33 = smul.addr %s29, 64
      %s34 = scalar_lea.hbm %s1, %s33
      %s36 = sshll.u32 [#allocation5], 4
      %s37 = int_to_ptr.vmem [resolvable:$true] %s36
      %39 = dma.hbm_to_vmem [thread:$0]  %s34, 64, %s37, [#allocation6]
    $region9: #{tpu_custom_call.1} parent=1 // pred_fallthru
      _
    // Predicated region
    $region10: #{tpu_custom_call.1} parent=1 // pred_check
      _
    $region11: #{tpu_custom_call.1} parent=1 // pred_check_branch
      %41 = sbr.rel (0) target = $region13
    $region12: #{tpu_custom_call.1} parent=1 // pred_region
      %42 = dma.done [#allocation3], 64
    $region13: #{tpu_custom_call.1} parent=1 // pred_fallthru
      _
    // Predicated region
    $region14: #{tpu_custom_call.1} parent=1 // pred_check
      _
    $region15: #{tpu_custom_call.1} parent=1 // pred_check_branch
      %44 = sbr.rel (0) target = $region17
    $region16: #{tpu_custom_call.1} parent=1 // pred_region
      %45 = dma.done [#allocation6], 64
    $region17: #{tpu_custom_call.1} parent=1 // pred_fallthru
      _
    %s46 = sadd.s32 0, 0
    %p47 = scmp.lt.s32.totalorder %s46, 0
    %s48 = scalar_select %p47, %s46, 0
    %s49 = sadd.s32 0, 0
    %p50 = scmp.lt.s32.totalorder %s49, 0
    %s51 = scalar_select %p50, %s49, 0
    %p52 = scmp.eq.s32.totalorder 0, 0
    // Predicated region
    $region18: #{tpu_custom_call.1} parent=1 // pred_check
      %p53 = pneg %p52
    $region19: #{tpu_custom_call.1} parent=1 // pred_check_branch
      %55 = sbr.rel (%p53) target = $region21
    $region20: #{tpu_custom_call.1} parent=1 // pred_region
      %56 = vst [vmem:[#allocation7] sm:$0x1] 0.0
    $region21: #{tpu_custom_call.1} parent=1 // pred_fallthru
      _
    %v57 = vld [vmem:[#allocation7] sm:$0x1]
    %v58 = vld [vmem:[#allocation2] sm:$0xf]
    %v59 = vld [vmem:[#allocation5] sm:$0xf]
    %v60 = vand.u32 2147483647, %v58
    %v61 = vsub.f32 0.0, %v60
    %v62 = vmul.f32 %v61, 1.442695
    %v63 = vpow.pop %v62
    %v64 = vadd.f32 %v63, 1.0
    %v65 = vlog2.pop %v64
    %v66 = vmul.f32 %v65, 0.6931472
    %v67 = vmul.f32 -0.5, %v63
    %v68 = vadd.f32 %v67, 1.0
    %v69 = vmul.f32 %v68, %v63
    %v70 = vand.u32 2147483647, %v63
    %vm71 = vcmp.lt.f32.partialorder %v70, 0.0004427343
    %v72 = vsel %vm71, %v69, %v66
    %v73 = vsub.f32 0.0, %v58
    %v74 = vmax.f32 %v73, 0.0
    %v75 = vadd.f32 %v74, %v72
    %v76 = vadd.f32 %v75, %v58
    %v77 = vmin.f32 %v75, 18.420681
    %v78 = vmin.f32 %v76, 18.420681
    %v79 = vsub.f32 %v77, %v78
    %v80 = vmul.f32 %v59, %v79
    %v81 = vadd.f32 %v78, %v80
    %vm82 = vcmask 1043456
    %v83 = vsel %vm82, %v81, 0.0
    %v84 = vrot.slane %v83, 4
    %v85 = vadd.f32 %v83, %v84
    %v86 = vrot.slane %v85, 2
    %v87 = vadd.f32 %v85, %v86
    %v88 = vrot.slane %v87, 1
    %v89 = vadd.f32 %v87, %v88
    %v90 = vadd.f32 %v57, %v89
    %91 = vst [vmem:[#allocation7] sm:$0x1] %v90
    // Predicated region
    $region22: #{tpu_custom_call.1} parent=1 // pred_check
      _
    $region23: #{tpu_custom_call.1} parent=1 // pred_check_branch
      %93 = sbr.rel (0) target = $region25
    $region24: #{tpu_custom_call.1} parent=1 // pred_region
      %s95 = ssub.s32 16, 16
      %96 = vsyncadd [#allocation4], %s95
      %s98 = sshll.u32 [#allocation7], 4
      %s99 = int_to_ptr.vmem [resolvable:$true] %s98
      %101 = dma.vmem_to_hbm [thread:$0]  %s99, 16, %s2, [#allocation4]
    $region25: #{tpu_custom_call.1} parent=1 // pred_fallthru
      _
    // Predicated region
    $region26: #{tpu_custom_call.1} parent=1 // pred_check
      _
    $region27: #{tpu_custom_call.1} parent=1 // pred_check_branch
      %103 = sbr.rel (0) target = $region29
    $region28: #{tpu_custom_call.1} parent=1 // pred_region
      %104 = dma.done [#allocation4], 16
    $region29: #{tpu_custom_call.1} parent=1 // pred_fallthru
      _
    %105 = vsyncpa [#allocation3], 1
    %106 = vsyncpa [#allocation6], 1
    %107 = vsyncpa [#allocation4], 1

</llo_original>
